<compile_context>
chip_gen: v5e
topology: v5e:2x2
jax: 0.10.0
libtpu: 0.0.40
codegen_flags: <defaults>
</compile_context>

<pallas_src>
import functools

import jax
import jax.numpy as jnp
from jax import lax
from jax.experimental import pallas as pl
from jax.experimental.pallas import tpu as pltpu


def _round_up(v, m):
    return ((v + m - 1) // m) * m


# ----------------------------------------------------------------------------------
# Fast path: VPU/XLU matvec recurrence (input_size=1, output_size=1, hidden_p==128).
# ----------------------------------------------------------------------------------
def _rnn_vpu_kernel(sc_ref, w_ref, wih_col_ref, b_col_ref, wlin_col_ref, out_ref,
                    *, seq, hidden_p):
    """sc_ref:      SMEM (seq+1,) f32 = [x_0..x_{seq-1}, b_lin]
       w_ref:       VMEM (2*Hp+8, Hp):
                      rows [0,Hp)   : W_hh            (w_a[j,k] = W_hh[j,k])
                      rows [Hp,2Hp) : W_hh^T          (w_b[k,j] = W_hh[j,k])
                      row 2Hp+0     : w_ih_row  (W_ih[:,0] on lanes)
                      row 2Hp+1     : b_row     (b_ih + b_hh on lanes)
                      row 2Hp+2     : w_lin_row (W_lin[0,:] on lanes)
       wih_col_ref / b_col_ref / wlin_col_ref: VMEM (Hp,1) column-oriented copies.
       out_ref:     VMEM (1,1)
    """
    Hp = hidden_p
    rb = 2 * Hp  # base row of the packed row-vectors

    # h starts as a (1, Hp) row of zeros; its orientation alternates each step so the
    # matvec is always "broadcast-multiply + cross-reduce" with NO transposes on the
    # serial dependence chain (the only truly latency-critical path in this kernel).
    h = jnp.zeros((1, Hp), jnp.float32)
    for t in range(seq):                       # static unroll (seq <= 64 on this path)
        x_t = sc_ref[t]                        # scalar from SMEM
        if t % 2 == 0:
            # h is a row:  pre[j] = sum_k W_hh[j,k] h[k]   (lane reduce)  -> column
            rec = jnp.sum(w_ref[0:Hp, :] * h, axis=1, keepdims=True)      # (Hp,1)
            pre = rec + x_t * wih_col_ref[...] + b_col_ref[...]
        else:
            # h is a column: pre[j] = sum_k W_hh[j,k] h[k] (sublane reduce) -> row
            rec = jnp.sum(w_ref[Hp:2 * Hp, :] * h, axis=0, keepdims=True)  # (1,Hp)
            pre = rec + x_t * w_ref[rb:rb + 1, :] + w_ref[rb + 1:rb + 2, :]
        h = jnp.maximum(pre, 0.0)              # nonlinearity='relu'

    # Final Linear (output_size == 1): VPU multiply + reduce; no MXU for one scalar.
    b_lin = sc_ref[seq]
    if seq % 2 == 1:       # last produced h is a column
        out = jnp.sum(h * wlin_col_ref[...], axis=0, keepdims=True) + b_lin
    else:                  # last produced h is a row
        out = jnp.sum(h * w_ref[rb + 2:rb + 3, :], axis=1, keepdims=True) + b_lin
    out_ref[...] = out


# ----------------------------------------------------------------------------------
# General path (any input/hidden/output size): MXU recurrence.
# ----------------------------------------------------------------------------------
def _rnn_mxu_kernel(x_ref, w_ih_t_ref, b_ref, w_hh_t_ref, w_lin_ref, b_lin_ref,
                    out_ref, *, seq, input_size, output_size, unrolled):
    hidden_p = w_hh_t_ref.shape[0]

    if unrolled:
        # Hoist the input projection (no serial dependence); keep it in vregs.
        if input_size == 1:
            xp = x_ref[...] * w_ih_t_ref[...] + b_ref[...]          # (seq,1)*(1,Hp)
        else:
            xp = jnp.dot(x_ref[...], w_ih_t_ref[...],
                         preferred_element_type=jnp.float32) + b_ref[...]
        h = jnp.zeros((1, hidden_p), jnp.float32)
        for t in range(seq):                                        # static unroll
            # W_hh is read from VMEM inside the loop (no vreg hoist): vld slots are
            # idle on the MXU-latency-bound chain and this avoids spills for Hp>=256.
            pre = xp[t:t + 1, :] + jnp.dot(h, w_hh_t_ref[...],
                                           preferred_element_type=jnp.float32)
            h = jnp.maximum(pre, 0.0)
    else:
        # Bounded unroll for long sequences; per-step input load pushed into the loop.
        def step(t, h):
            x_t = x_ref[pl.ds(t, 1), :]                             # (1, input_size)
            if input_size == 1:
                inp = x_t * w_ih_t_ref[...]
            else:
                inp = jnp.dot(x_t, w_ih_t_ref[...],
                              preferred_element_type=jnp.float32)
            pre = inp + b_ref[...] + jnp.dot(h, w_hh_t_ref[...],
                                             preferred_element_type=jnp.float32)
            return jnp.maximum(pre, 0.0)
        h = lax.fori_loop(0, seq, step, jnp.zeros((1, hidden_p), jnp.float32),
                          unroll=8)

    if output_size == 1:
        out_ref[...] = (jnp.sum(h * w_lin_ref[...], axis=-1, keepdims=True)
                        + b_lin_ref[...])
    else:
        out_ref[...] = (jnp.dot(h, w_lin_ref[...],
                                preferred_element_type=jnp.float32)
                        + b_lin_ref[...])


# ----------------------------------------------------------------------------------
# One-time parameter preparation (hoisted out of the per-call path).
# ----------------------------------------------------------------------------------
def prepare_rnn_params(w_ih, w_hh, b_ih, b_hh, w_lin, b_lin):
    hidden, input_size = w_ih.shape
    output_size = w_lin.shape[0]
    hidden_p = max(128, _round_up(hidden, 128))

    w_ih = jnp.asarray(w_ih, jnp.float32)
    w_hh = jnp.asarray(w_hh, jnp.float32)
    w_lin = jnp.asarray(w_lin, jnp.float32)
    b = jnp.asarray(b_ih, jnp.float32) + jnp.asarray(b_hh, jnp.float32)
    b_lin = jnp.asarray(b_lin, jnp.float32).reshape(output_size)

    fast = (input_size == 1 and output_size == 1 and hidden_p == 128)
    params = dict(fast=fast, hidden=hidden, hidden_p=hidden_p,
                  input_size=input_size, output_size=output_size)

    if fast:
        Hp = hidden_p
        # Packed weight slab: one DMA instead of five.  Zero padding is exact:
        # padded weight rows/cols and biases are zero, so padded hidden lanes stay 0
        # through ReLU and contribute nothing to the output.
        slab = jnp.zeros((2 * Hp + 8, Hp), jnp.float32)
        slab = slab.at[:hidden, :hidden].set(w_hh)                 # W_hh (original)
        slab = slab.at[Hp:Hp + hidden, :hidden].set(w_hh.T)        # W_hh^T
        slab = slab.at[2 * Hp + 0, :hidden].set(w_ih[:, 0])        # w_ih_row
        slab = slab.at[2 * Hp + 1, :hidden].set(b)                 # b_row
        slab = slab.at[2 * Hp + 2, :hidden].set(w_lin[0])          # w_lin_row
        params["w_slab"] = slab
        params["wih_col"] = jnp.zeros((Hp, 1), jnp.float32).at[:hidden, 0].set(w_ih[:, 0])
        params["b_col"] = jnp.zeros((Hp, 1), jnp.float32).at[:hidden, 0].set(b)
        params["wlin_col"] = jnp.zeros((Hp, 1), jnp.float32).at[:hidden, 0].set(w_lin[0])
        params["b_lin"] = b_lin                                    # (1,)
    else:
        params["w_ih_t"] = jnp.zeros((input_size, hidden_p), jnp.float32).at[:, :hidden].set(w_ih.T)
        params["w_hh_t"] = jnp.zeros((hidden_p, hidden_p), jnp.float32).at[:hidden, :hidden].set(w_hh.T)
        params["b_row"] = jnp.zeros((1, hidden_p), jnp.float32).at[0, :hidden].set(b)
        if output_size == 1:
            params["w_lin_p"] = jnp.zeros((1, hidden_p), jnp.float32).at[0, :hidden].set(w_lin[0])
        else:
            params["w_lin_p"] = jnp.zeros((hidden_p, output_size), jnp.float32).at[:hidden, :].set(w_lin.T)
        params["b_lin2"] = b_lin.reshape(1, output_size)
    return params


# ----------------------------------------------------------------------------------
# Per-call jitted wrappers.
# ----------------------------------------------------------------------------------
@jax.jit
def _rnn_fast_call(x, w_slab, wih_col, b_col, wlin_col, b_lin):
    seq = x.shape[0]
    hidden_p = w_slab.shape[1]
    sc = jnp.concatenate([x.reshape(seq).astype(jnp.float32),
                          b_lin.reshape(1).astype(jnp.float32)])
    out = pl.pallas_call(
        functools.partial(_rnn_vpu_kernel, seq=seq, hidden_p=hidden_p),
        out_shape=jax.ShapeDtypeStruct((1, 1), jnp.float32),
        in_specs=[pl.BlockSpec(memory_space=pltpu.MemorySpace.SMEM),
                  pl.BlockSpec(memory_space=pltpu.MemorySpace.VMEM),
                  pl.BlockSpec(memory_space=pltpu.MemorySpace.VMEM),
                  pl.BlockSpec(memory_space=pltpu.MemorySpace.VMEM),
                  pl.BlockSpec(memory_space=pltpu.MemorySpace.VMEM)],
        out_specs=pl.BlockSpec(memory_space=pltpu.MemorySpace.VMEM),
    )(sc, w_slab, wih_col, b_col, wlin_col)
    return out[0]                                                  # (1,)


@jax.jit
def _rnn_general_call(x, w_ih_t, b_row, w_hh_t, w_lin_p, b_lin2):
    seq, input_size = x.shape
    hidden_p = w_hh_t.shape[0]
    output_size = b_lin2.shape[1]
    unrolled = seq <= 64

    # Explicit scoped-VMEM limit for large hidden (matters most on v5e's 16 MiB default).
    bytes_needed = 4 * (seq * input_size + input_size * hidden_p + hidden_p
                        + hidden_p * hidden_p + w_lin_p.size + output_size + output_size)
    cp = None
    if 2 * bytes_needed > (16 << 20):
        cp = pltpu.CompilerParams(vmem_limit_bytes=min(2 * bytes_needed + (2 << 20),
                                                       96 * 1024 * 1024))

    out = pl.pallas_call(
        functools.partial(_rnn_mxu_kernel, seq=seq, input_size=input_size,
                          output_size=output_size, unrolled=unrolled),
        out_shape=jax.ShapeDtypeStruct((1, output_size), jnp.float32),
        in_specs=[pl.BlockSpec(memory_space=pltpu.MemorySpace.VMEM)] * 6,
        out_specs=pl.BlockSpec(memory_space=pltpu.MemorySpace.VMEM),
        compiler_params=cp,
    )(x.astype(jnp.float32), w_ih_t, b_row, w_hh_t, w_lin_p, b_lin2)
    return out[0]                                                  # (output_size,)


def rnn_apply(x, params):
    """x: (seq, input_size) (or (seq,) if input_size==1). Returns predictions[-1]."""
    x = jnp.asarray(x, jnp.float32)
    if x.ndim == 1:
        x = x.reshape(-1, 1)
    seq = x.shape[0]
    if params["fast"] and seq <= 64:
        return _rnn_fast_call(x, params["w_slab"], params["wih_col"],
                              params["b_col"], params["wlin_col"], params["b_lin"])
    if params["fast"]:
        # Long-sequence fallback for the default config goes through the general path;
        # rebuild its (cheap) padded views once here.
        # TODO(synk): add a fori_loop (pair-of-steps) variant of the VPU path for long seq.
        gp = prepare_rnn_params(
            params["w_slab"][:params["hidden"], :params["hidden"]].T[:, :1] * 0,  # placeholder, unused
            params["w_slab"][:params["hidden"], :params["hidden"]],
            params["b_col"][:params["hidden"], 0], params["b_col"][:params["hidden"], 0] * 0,
            params["wlin_col"][:params["hidden"], 0].reshape(1, -1), params["b_lin"])
    return _rnn_general_call(x, params["w_ih_t"], params["b_row"], params["w_hh_t"],
                             params["w_lin_p"], params["b_lin2"])


def rnn_forward(x, w_ih, w_hh, b_ih, b_hh, w_lin, b_lin):
    """Convenience one-shot wrapper (prepares params, then applies)."""
    return rnn_apply(x, prepare_rnn_params(w_ih, w_hh, b_ih, b_hh, w_lin, b_lin))


def ref_forward(x, w_ih, w_hh, b_ih, b_hh, w_lin, b_lin):
    """Pure-JAX reference mirroring torch.nn.RNN(relu) + Linear, last step."""
    hidden = w_hh.shape[0]
    h = jnp.zeros((hidden,), jnp.float32)
    for t in range(x.shape[0]):
        h = jnp.maximum(w_ih @ x[t] + b_ih + w_hh @ h + b_hh, 0.0)
    return w_lin @ h + b_lin


if __name__ == "__main__":
    # Module defaults: input_size=1, hidden_layer_size=64, output_size=1, relu.
    seq_len, input_size, hidden, output_size = 8, 1, 64, 1

    key = jax.random.PRNGKey(0)
    k_x, k1, k2, k3, k4, k5, k6 = jax.random.split(key, 7)

    bound = 1.0 / jnp.sqrt(jnp.float32(hidden))
    w_ih = jax.random.uniform(k1, (hidden, input_size), jnp.float32, -bound, bound)
    w_hh = jax.random.uniform(k2, (hidden, hidden), jnp.float32, -bound, bound)
    b_ih = jax.random.uniform(k3, (hidden,), jnp.float32, -bound, bound)
    b_hh = jax.random.uniform(k4, (hidden,), jnp.float32, -bound, bound)
    w_lin = jax.random.uniform(k5, (output_size, hidden), jnp.float32, -bound, bound)
    b_lin = jax.random.uniform(k6, (output_size,), jnp.float32, -bound, bound)

    x = jax.random.normal(k_x, (seq_len, input_size), jnp.float32)

    params = prepare_rnn_params(w_ih, w_hh, b_ih, b_hh, w_lin, b_lin)   # once, at "init"
    out = rnn_apply(x, params)
    out = jax.block_until_ready(out)

    expected = ref_forward(x, w_ih, w_hh, b_ih, b_hh, w_lin, b_lin)
    assert out.shape == (output_size,), out.shape
    assert jnp.allclose(out, expected, atol=1e-5, rtol=1e-5), (out, expected)

    print("KERNEL_OK")
</pallas_src>

<mosaic_0001>
module attributes {stable_mosaic.version = 11 : i64} {
  func.func @_rnn_vpu_kernel(%arg0: memref<9xf32, #tpu.memory_space<smem>>, %arg1: memref<264x128xf32, #tpu.memory_space<vmem>>, %arg2: memref<128x1xf32, #tpu.memory_space<vmem>>, %arg3: memref<128x1xf32, #tpu.memory_space<vmem>>, %arg4: memref<128x1xf32, #tpu.memory_space<vmem>>, %arg5: memref<1x1xf32, #tpu.memory_space<vmem>>) attributes {dimension_semantics = [], scalar_prefetch = 0 : i64, scratch_operands = 0 : i64, tpu.core_type = #tpu.core_type<tc>} {
    %cst = arith.constant 0.000000e+00 : f32
    %0 = vector.broadcast %cst : f32 to vector<1x128xf32>
    %c0 = arith.constant 0 : index
    %1 = memref.load %arg0[%c0] : memref<9xf32, #tpu.memory_space<smem>>
    %c0_0 = arith.constant 0 : index
    %c0_1 = arith.constant 0 : index
    %2 = vector.load %arg1[%c0_0, %c0_1] : memref<264x128xf32, #tpu.memory_space<vmem>>, vector<128x128xf32>
    %3 = vector.broadcast %0 : vector<1x128xf32> to vector<128x128xf32>
    %4 = arith.mulf %2, %3 : vector<128x128xf32>
    %cst_2 = arith.constant dense<0.000000e+00> : vector<128xf32>
    %5 = vector.multi_reduction <add>, %4, %cst_2 [1] : vector<128x128xf32> to vector<128xf32>
    %6 = vector.shape_cast %5 : vector<128xf32> to vector<128x1xf32>
    %c0_3 = arith.constant 0 : index
    %c0_4 = arith.constant 0 : index
    %7 = vector.load %arg2[%c0_3, %c0_4] : memref<128x1xf32, #tpu.memory_space<vmem>>, vector<128x1xf32>
    %8 = vector.broadcast %1 : f32 to vector<128x1xf32>
    %9 = arith.mulf %8, %7 : vector<128x1xf32>
    %10 = arith.addf %6, %9 : vector<128x1xf32>
    %c0_5 = arith.constant 0 : index
    %c0_6 = arith.constant 0 : index
    %11 = vector.load %arg3[%c0_5, %c0_6] : memref<128x1xf32, #tpu.memory_space<vmem>>, vector<128x1xf32>
    %12 = arith.addf %10, %11 : vector<128x1xf32>
    %cst_7 = arith.constant 0.000000e+00 : f32
    %13 = vector.broadcast %cst_7 : f32 to vector<128x1xf32>
    %14 = arith.maximumf %12, %13 : vector<128x1xf32>
    %c1 = arith.constant 1 : index
    %15 = memref.load %arg0[%c1] : memref<9xf32, #tpu.memory_space<smem>>
    %c128 = arith.constant 128 : index
    %c0_8 = arith.constant 0 : index
    %16 = vector.load %arg1[%c128, %c0_8] : memref<264x128xf32, #tpu.memory_space<vmem>>, vector<128x128xf32>
    %17 = vector.broadcast %14 : vector<128x1xf32> to vector<128x128xf32>
    %18 = arith.mulf %16, %17 : vector<128x128xf32>
    %cst_9 = arith.constant dense<0.000000e+00> : vector<128xf32>
    %19 = vector.multi_reduction <add>, %18, %cst_9 [0] : vector<128x128xf32> to vector<128xf32>
    %20 = vector.shape_cast %19 : vector<128xf32> to vector<1x128xf32>
    %c256 = arith.constant 256 : index
    %c0_10 = arith.constant 0 : index
    %21 = vector.load %arg1[%c256, %c0_10] : memref<264x128xf32, #tpu.memory_space<vmem>>, vector<1x128xf32>
    %22 = vector.broadcast %15 : f32 to vector<1x128xf32>
    %23 = arith.mulf %22, %21 : vector<1x128xf32>
    %24 = arith.addf %20, %23 : vector<1x128xf32>
    %c257 = arith.constant 257 : index
    %c0_11 = arith.constant 0 : index
    %25 = vector.load %arg1[%c257, %c0_11] : memref<264x128xf32, #tpu.memory_space<vmem>>, vector<1x128xf32>
    %26 = arith.addf %24, %25 : vector<1x128xf32>
    %cst_12 = arith.constant 0.000000e+00 : f32
    %27 = vector.broadcast %cst_12 : f32 to vector<1x128xf32>
    %28 = arith.maximumf %26, %27 : vector<1x128xf32>
    %c2 = arith.constant 2 : index
    %29 = memref.load %arg0[%c2] : memref<9xf32, #tpu.memory_space<smem>>
    %c0_13 = arith.constant 0 : index
    %c0_14 = arith.constant 0 : index
    %30 = vector.load %arg1[%c0_13, %c0_14] : memref<264x128xf32, #tpu.memory_space<vmem>>, vector<128x128xf32>
    %31 = vector.broadcast %28 : vector<1x128xf32> to vector<128x128xf32>
    %32 = arith.mulf %30, %31 : vector<128x128xf32>
    %cst_15 = arith.constant dense<0.000000e+00> : vector<128xf32>
    %33 = vector.multi_reduction <add>, %32, %cst_15 [1] : vector<128x128xf32> to vector<128xf32>
    %34 = vector.shape_cast %33 : vector<128xf32> to vector<128x1xf32>
    %c0_16 = arith.constant 0 : index
    %c0_17 = arith.constant 0 : index
    %35 = vector.load %arg2[%c0_16, %c0_17] : memref<128x1xf32, #tpu.memory_space<vmem>>, vector<128x1xf32>
    %36 = vector.broadcast %29 : f32 to vector<128x1xf32>
    %37 = arith.mulf %36, %35 : vector<128x1xf32>
    %38 = arith.addf %34, %37 : vector<128x1xf32>
    %c0_18 = arith.constant 0 : index
    %c0_19 = arith.constant 0 : index
    %39 = vector.load %arg3[%c0_18, %c0_19] : memref<128x1xf32, #tpu.memory_space<vmem>>, vector<128x1xf32>
    %40 = arith.addf %38, %39 : vector<128x1xf32>
    %cst_20 = arith.constant 0.000000e+00 : f32
    %41 = vector.broadcast %cst_20 : f32 to vector<128x1xf32>
    %42 = arith.maximumf %40, %41 : vector<128x1xf32>
    %c3 = arith.constant 3 : index
    %43 = memref.load %arg0[%c3] : memref<9xf32, #tpu.memory_space<smem>>
    %c128_21 = arith.constant 128 : index
    %c0_22 = arith.constant 0 : index
    %44 = vector.load %arg1[%c128_21, %c0_22] : memref<264x128xf32, #tpu.memory_space<vmem>>, vector<128x128xf32>
    %45 = vector.broadcast %42 : vector<128x1xf32> to vector<128x128xf32>
    %46 = arith.mulf %44, %45 : vector<128x128xf32>
    %cst_23 = arith.constant dense<0.000000e+00> : vector<128xf32>
    %47 = vector.multi_reduction <add>, %46, %cst_23 [0] : vector<128x128xf32> to vector<128xf32>
    %48 = vector.shape_cast %47 : vector<128xf32> to vector<1x128xf32>
    %c256_24 = arith.constant 256 : index
    %c0_25 = arith.constant 0 : index
    %49 = vector.load %arg1[%c256_24, %c0_25] : memref<264x128xf32, #tpu.memory_space<vmem>>, vector<1x128xf32>
    %50 = vector.broadcast %43 : f32 to vector<1x128xf32>
    %51 = arith.mulf %50, %49 : vector<1x128xf32>
    %52 = arith.addf %48, %51 : vector<1x128xf32>
    %c257_26 = arith.constant 257 : index
    %c0_27 = arith.constant 0 : index
    %53 = vector.load %arg1[%c257_26, %c0_27] : memref<264x128xf32, #tpu.memory_space<vmem>>, vector<1x128xf32>
    %54 = arith.addf %52, %53 : vector<1x128xf32>
    %cst_28 = arith.constant 0.000000e+00 : f32
    %55 = vector.broadcast %cst_28 : f32 to vector<1x128xf32>
    %56 = arith.maximumf %54, %55 : vector<1x128xf32>
    %c4 = arith.constant 4 : index
    %57 = memref.load %arg0[%c4] : memref<9xf32, #tpu.memory_space<smem>>
    %c0_29 = arith.constant 0 : index
    %c0_30 = arith.constant 0 : index
    %58 = vector.load %arg1[%c0_29, %c0_30] : memref<264x128xf32, #tpu.memory_space<vmem>>, vector<128x128xf32>
    %59 = vector.broadcast %56 : vector<1x128xf32> to vector<128x128xf32>
    %60 = arith.mulf %58, %59 : vector<128x128xf32>
    %cst_31 = arith.constant dense<0.000000e+00> : vector<128xf32>
    %61 = vector.multi_reduction <add>, %60, %cst_31 [1] : vector<128x128xf32> to vector<128xf32>
    %62 = vector.shape_cast %61 : vector<128xf32> to vector<128x1xf32>
    %c0_32 = arith.constant 0 : index
    %c0_33 = arith.constant 0 : index
    %63 = vector.load %arg2[%c0_32, %c0_33] : memref<128x1xf32, #tpu.memory_space<vmem>>, vector<128x1xf32>
    %64 = vector.broadcast %57 : f32 to vector<128x1xf32>
    %65 = arith.mulf %64, %63 : vector<128x1xf32>
    %66 = arith.addf %62, %65 : vector<128x1xf32>
    %c0_34 = arith.constant 0 : index
    %c0_35 = arith.constant 0 : index
    %67 = vector.load %arg3[%c0_34, %c0_35] : memref<128x1xf32, #tpu.memory_space<vmem>>, vector<128x1xf32>
    %68 = arith.addf %66, %67 : vector<128x1xf32>
    %cst_36 = arith.constant 0.000000e+00 : f32
    %69 = vector.broadcast %cst_36 : f32 to vector<128x1xf32>
    %70 = arith.maximumf %68, %69 : vector<128x1xf32>
    %c5 = arith.constant 5 : index
    %71 = memref.load %arg0[%c5] : memref<9xf32, #tpu.memory_space<smem>>
    %c128_37 = arith.constant 128 : index
    %c0_38 = arith.constant 0 : index
    %72 = vector.load %arg1[%c128_37, %c0_38] : memref<264x128xf32, #tpu.memory_space<vmem>>, vector<128x128xf32>
    %73 = vector.broadcast %70 : vector<128x1xf32> to vector<128x128xf32>
    %74 = arith.mulf %72, %73 : vector<128x128xf32>
    %cst_39 = arith.constant dense<0.000000e+00> : vector<128xf32>
    %75 = vector.multi_reduction <add>, %74, %cst_39 [0] : vector<128x128xf32> to vector<128xf32>
    %76 = vector.shape_cast %75 : vector<128xf32> to vector<1x128xf32>
    %c256_40 = arith.constant 256 : index
    %c0_41 = arith.constant 0 : index
    %77 = vector.load %arg1[%c256_40, %c0_41] : memref<264x128xf32, #tpu.memory_space<vmem>>, vector<1x128xf32>
    %78 = vector.broadcast %71 : f32 to vector<1x128xf32>
    %79 = arith.mulf %78, %77 : vector<1x128xf32>
    %80 = arith.addf %76, %79 : vector<1x128xf32>
    %c257_42 = arith.constant 257 : index
    %c0_43 = arith.constant 0 : index
    %81 = vector.load %arg1[%c257_42, %c0_43] : memref<264x128xf32, #tpu.memory_space<vmem>>, vector<1x128xf32>
    %82 = arith.addf %80, %81 : vector<1x128xf32>
    %cst_44 = arith.constant 0.000000e+00 : f32
    %83 = vector.broadcast %cst_44 : f32 to vector<1x128xf32>
    %84 = arith.maximumf %82, %83 : vector<1x128xf32>
    %c6 = arith.constant 6 : index
    %85 = memref.load %arg0[%c6] : memref<9xf32, #tpu.memory_space<smem>>
    %c0_45 = arith.constant 0 : index
    %c0_46 = arith.constant 0 : index
    %86 = vector.load %arg1[%c0_45, %c0_46] : memref<264x128xf32, #tpu.memory_space<vmem>>, vector<128x128xf32>
    %87 = vector.broadcast %84 : vector<1x128xf32> to vector<128x128xf32>
    %88 = arith.mulf %86, %87 : vector<128x128xf32>
    %cst_47 = arith.constant dense<0.000000e+00> : vector<128xf32>
    %89 = vector.multi_reduction <add>, %88, %cst_47 [1] : vector<128x128xf32> to vector<128xf32>
    %90 = vector.shape_cast %89 : vector<128xf32> to vector<128x1xf32>
    %c0_48 = arith.constant 0 : index
    %c0_49 = arith.constant 0 : index
    %91 = vector.load %arg2[%c0_48, %c0_49] : memref<128x1xf32, #tpu.memory_space<vmem>>, vector<128x1xf32>
    %92 = vector.broadcast %85 : f32 to vector<128x1xf32>
    %93 = arith.mulf %92, %91 : vector<128x1xf32>
    %94 = arith.addf %90, %93 : vector<128x1xf32>
    %c0_50 = arith.constant 0 : index
    %c0_51 = arith.constant 0 : index
    %95 = vector.load %arg3[%c0_50, %c0_51] : memref<128x1xf32, #tpu.memory_space<vmem>>, vector<128x1xf32>
    %96 = arith.addf %94, %95 : vector<128x1xf32>
    %cst_52 = arith.constant 0.000000e+00 : f32
    %97 = vector.broadcast %cst_52 : f32 to vector<128x1xf32>
    %98 = arith.maximumf %96, %97 : vector<128x1xf32>
    %c7 = arith.constant 7 : index
    %99 = memref.load %arg0[%c7] : memref<9xf32, #tpu.memory_space<smem>>
    %c128_53 = arith.constant 128 : index
    %c0_54 = arith.constant 0 : index
    %100 = vector.load %arg1[%c128_53, %c0_54] : memref<264x128xf32, #tpu.memory_space<vmem>>, vector<128x128xf32>
    %101 = vector.broadcast %98 : vector<128x1xf32> to vector<128x128xf32>
    %102 = arith.mulf %100, %101 : vector<128x128xf32>
    %cst_55 = arith.constant dense<0.000000e+00> : vector<128xf32>
    %103 = vector.multi_reduction <add>, %102, %cst_55 [0] : vector<128x128xf32> to vector<128xf32>
    %104 = vector.shape_cast %103 : vector<128xf32> to vector<1x128xf32>
    %c256_56 = arith.constant 256 : index
    %c0_57 = arith.constant 0 : index
    %105 = vector.load %arg1[%c256_56, %c0_57] : memref<264x128xf32, #tpu.memory_space<vmem>>, vector<1x128xf32>
    %106 = vector.broadcast %99 : f32 to vector<1x128xf32>
    %107 = arith.mulf %106, %105 : vector<1x128xf32>
    %108 = arith.addf %104, %107 : vector<1x128xf32>
    %c257_58 = arith.constant 257 : index
    %c0_59 = arith.constant 0 : index
    %109 = vector.load %arg1[%c257_58, %c0_59] : memref<264x128xf32, #tpu.memory_space<vmem>>, vector<1x128xf32>
    %110 = arith.addf %108, %109 : vector<1x128xf32>
    %cst_60 = arith.constant 0.000000e+00 : f32
    %111 = vector.broadcast %cst_60 : f32 to vector<1x128xf32>
    %112 = arith.maximumf %110, %111 : vector<1x128xf32>
    %c8 = arith.constant 8 : index
    %113 = memref.load %arg0[%c8] : memref<9xf32, #tpu.memory_space<smem>>
    %c258 = arith.constant 258 : index
    %c0_61 = arith.constant 0 : index
    %114 = vector.load %arg1[%c258, %c0_61] : memref<264x128xf32, #tpu.memory_space<vmem>>, vector<1x128xf32>
    %115 = arith.mulf %112, %114 : vector<1x128xf32>
    %cst_62 = arith.constant dense<0.000000e+00> : vector<1xf32>
    %116 = vector.multi_reduction <add>, %115, %cst_62 [1] : vector<1x128xf32> to vector<1xf32>
    %117 = vector.shape_cast %116 : vector<1xf32> to vector<1x1xf32>
    %118 = vector.broadcast %113 : f32 to vector<1x1xf32>
    %119 = arith.addf %117, %118 : vector<1x1xf32>
    %c0_63 = arith.constant 0 : index
    %c0_64 = arith.constant 0 : index
    %120 = vector.load %arg5[%c0_63, %c0_64] : memref<1x1xf32, #tpu.memory_space<vmem>>, vector<1x1xf32>
    tpu.vector_store %arg5[%c0_63, %c0_64], %119 {strides = array<i32>} : memref<1x1xf32, #tpu.memory_space<vmem>>, vector<1x1xf32>,
    return
  }
}

</mosaic_0001>

<llo_original>
// kernel: _rnn_fast_call.1
$region0: #{_rnn_fast_call.1}
  #allocation0 [shape = 'u32[]', space=smem, size = 0x4, offset = 0x4, fixed_abs, tag = 'smem constant byte address 0x4 - core index']
  #allocation1 [shape = 'u32[72,128]{1,0:T(1,128)}', space=vmem, size = 0x9000, scoped, tag = 'internal scratch']
  %s0 = inlined_call_operand.vmem [shape: f32[9], index: 0, kind: input, shape index: {}]
  %s1 = inlined_call_operand.hbm [shape: f32[264,128], index: 1, kind: input, shape index: {}]
  %s2 = inlined_call_operand.vmem [shape: f32[128,1], index: 2, kind: input, shape index: {}]
  %s3 = inlined_call_operand.vmem [shape: f32[128,1], index: 3, kind: input, shape index: {}]
  %s4 = inlined_call_operand.vmem [shape: f32[128,1], index: 4, kind: input, shape index: {}]
  %s5 = inlined_call_operand.hbm [shape: f32[1,1], index: 5, kind: output, shape index: {}]
  %s6 = sld [smem:[#allocation0]]
  $region38: #{_rnn_fast_call.1} parent=0
    _
  %s8 = ssub.s32 1, %s6
  %s9 = scalar_select 0, %s8, %s6
  $region1: #{_rnn_fast_call.1} parent=0
    #allocation2 [shape = 'u8[512]{0}', space=smem, size = 0x200, scoped, tag = 'input window, operand 0, single buffered']
    #allocation3 [shape = 's32[1]{0}', space=sflag, size = 0x4, scoped, tag = 'scoped memory for _rnn_fast_call.1']
    #allocation4 [shape = 's32[1]{0}', space=sflag, size = 0x4, scoped, tag = 'scoped memory for _rnn_fast_call.1']
    #allocation5 [shape = 's32[1]{0}', space=sflag, size = 0x4, scoped, tag = 'scoped memory for _rnn_fast_call.1']
    #allocation6 [shape = 'u8[135168]{0}', space=vmem, size = 0x21000, scoped, tag = 'input window, operand 1, single buffered']
    #allocation7 [shape = 'u8[512]{0}', space=vmem, size = 0x400, scoped, tag = 'output window, operand 0, single buffered']
    %10 = vsyncpa [#allocation5], 0
    %11 = vsyncpa [#allocation3], 0
    %12 = vsyncpa [#allocation4], 0
    // Predicated region
    $region2: #{_rnn_fast_call.1} parent=1 // pred_check
      _
    $region3: #{_rnn_fast_call.1} parent=1 // pred_check_branch
      %14 = sbr.rel (0) target = $region5
    $region4: #{_rnn_fast_call.1} parent=1 // pred_region
      %16 = vsyncadd [#allocation5], 0
      %s18 = sshll.u32 %s0, 4
      %s19 = int_to_ptr.vmem [resolvable:$true] %s18
      %21 = dma.vmem_to_smem %s19, 16, [#allocation2], [#allocation5]
    $region5: #{_rnn_fast_call.1} parent=1 // pred_fallthru
      _
    // Predicated region
    $region6: #{_rnn_fast_call.1} parent=1 // pred_check
      _
    $region7: #{_rnn_fast_call.1} parent=1 // pred_check_branch
      %23 = sbr.rel (0) target = $region9
    $region8: #{_rnn_fast_call.1} parent=1 // pred_region
      %25 = vsyncadd [#allocation3], 0
      %s26 = sshll.u32 %s1, 4
      %s27 = int_to_ptr.hbm [resolvable:$true] %s26
      %s28 = sshll.u32 [#allocation6], 4
      %s29 = int_to_ptr.vmem [resolvable:$true] %s28
      %34 = dma.hbm_to_vmem [thread:$0]  %s27, 4224, %s29, [#allocation3], 128, 128, 8
    $region9: #{_rnn_fast_call.1} parent=1 // pred_fallthru
      _
    // Predicated region
    $region10: #{_rnn_fast_call.1} parent=1 // pred_check
      _
    $region11: #{_rnn_fast_call.1} parent=1 // pred_check_branch
      %36 = sbr.rel (0) target = $region13
    $region12: #{_rnn_fast_call.1} parent=1 // pred_region
      _
    $region13: #{_rnn_fast_call.1} parent=1 // pred_fallthru
      _
    // Predicated region
    $region14: #{_rnn_fast_call.1} parent=1 // pred_check
      _
    $region15: #{_rnn_fast_call.1} parent=1 // pred_check_branch
      %38 = sbr.rel (0) target = $region17
    $region16: #{_rnn_fast_call.1} parent=1 // pred_region
      _
    $region17: #{_rnn_fast_call.1} parent=1 // pred_fallthru
      _
    // Predicated region
    $region18: #{_rnn_fast_call.1} parent=1 // pred_check
      _
    $region19: #{_rnn_fast_call.1} parent=1 // pred_check_branch
      %40 = sbr.rel (0) target = $region21
    $region20: #{_rnn_fast_call.1} parent=1 // pred_region
      _
    $region21: #{_rnn_fast_call.1} parent=1 // pred_fallthru
      _
    // Predicated region
    $region22: #{_rnn_fast_call.1} parent=1 // pred_check
      _
    $region23: #{_rnn_fast_call.1} parent=1 // pred_check_branch
      %42 = sbr.rel (0) target = $region25
    $region24: #{_rnn_fast_call.1} parent=1 // pred_region
      %44 = dma.done [#allocation5], 16
    $region25: #{_rnn_fast_call.1} parent=1 // pred_fallthru
      _
    // Predicated region
    $region26: #{_rnn_fast_call.1} parent=1 // pred_check
      _
    $region27: #{_rnn_fast_call.1} parent=1 // pred_check_branch
      %46 = sbr.rel (0) target = $region29
    $region28: #{_rnn_fast_call.1} parent=1 // pred_region
      %48 = dma.done [#allocation3], 4224
    $region29: #{_rnn_fast_call.1} parent=1 // pred_fallthru
      _
    %49 = sfence
    %s50 = sld [smem:[#allocation2]]
    %v51 = vld [vmem:[#allocation6] sm:$0xff]
    %v52 = vld [vmem:[#allocation6 + $0x8] sm:$0xff]
    %v53 = vld [vmem:[#allocation6 + $0x10] sm:$0xff]
    %v54 = vld [vmem:[#allocation6 + $0x18] sm:$0xff]
    %v55 = vld [vmem:[#allocation6 + $0x20] sm:$0xff]
    %v56 = vld [vmem:[#allocation6 + $0x28] sm:$0xff]
    %v57 = vld [vmem:[#allocation6 + $0x30] sm:$0xff]
    %v58 = vld [vmem:[#allocation6 + $0x38] sm:$0xff]
    %v59 = vld [vmem:[#allocation6 + $0x40] sm:$0xff]
    %v60 = vld [vmem:[#allocation6 + $0x48] sm:$0xff]
    %v61 = vld [vmem:[#allocation6 + $0x50] sm:$0xff]
    %v62 = vld [vmem:[#allocation6 + $0x58] sm:$0xff]
    %v63 = vld [vmem:[#allocation6 + $0x60] sm:$0xff]
    %v64 = vld [vmem:[#allocation6 + $0x68] sm:$0xff]
    %v65 = vld [vmem:[#allocation6 + $0x70] sm:$0xff]
    %v66 = vld [vmem:[#allocation6 + $0x78] sm:$0xff]
    %v67 = vmul.f32 %v51, 0.0
    %v68 = vmul.f32 %v52, 0.0
    %v69 = vmul.f32 %v53, 0.0
    %v70 = vmul.f32 %v54, 0.0
    %v71 = vmul.f32 %v55, 0.0
    %v72 = vmul.f32 %v56, 0.0
    %v73 = vmul.f32 %v57, 0.0
    %v74 = vmul.f32 %v58, 0.0
    %v75 = vmul.f32 %v59, 0.0
    %v76 = vmul.f32 %v60, 0.0
    %v77 = vmul.f32 %v61, 0.0
    %v78 = vmul.f32 %v62, 0.0
    %v79 = vmul.f32 %v63, 0.0
    %v80 = vmul.f32 %v64, 0.0
    %v81 = vmul.f32 %v65, 0.0
    %v82 = vmul.f32 %v66, 0.0
    %83 = vadd.xlane.f32.xlu0 %v67
    %v84 = vpop.xlane.xlu0 %83
    %85 = vadd.xlane.f32.xlu0 %v68
    %v86 = vpop.xlane.xlu0 %85
    %87 = vadd.xlane.f32.xlu0 %v69
    %v88 = vpop.xlane.xlu0 %87
    %89 = vadd.xlane.f32.xlu0 %v70
    %v90 = vpop.xlane.xlu0 %89
    %91 = vadd.xlane.f32.xlu0 %v71
    %v92 = vpop.xlane.xlu0 %91
    %93 = vadd.xlane.f32.xlu0 %v72
    %v94 = vpop.xlane.xlu0 %93
    %95 = vadd.xlane.f32.xlu0 %v73
    %v96 = vpop.xlane.xlu0 %95
    %97 = vadd.xlane.f32.xlu0 %v74
    %v98 = vpop.xlane.xlu0 %97
    %99 = vadd.xlane.f32.xlu0 %v75
    %v100 = vpop.xlane.xlu0 %99
    %101 = vadd.xlane.f32.xlu0 %v76
    %v102 = vpop.xlane.xlu0 %101
    %103 = vadd.xlane.f32.xlu0 %v77
    %v104 = vpop.xlane.xlu0 %103
    %105 = vadd.xlane.f32.xlu0 %v78
    %v106 = vpop.xlane.xlu0 %105
    %107 = vadd.xlane.f32.xlu0 %v79
    %v108 = vpop.xlane.xlu0 %107
    %109 = vadd.xlane.f32.xlu0 %v80
    %v110 = vpop.xlane.xlu0 %109
    %111 = vadd.xlane.f32.xlu0 %v81
    %v112 = vpop.xlane.xlu0 %111
    %113 = vadd.xlane.f32.xlu0 %v82
    %v114 = vpop.xlane.xlu0 %113
    %v115 = vld [vmem:[%s2] sm:$0xff]
    %v116 = vld [vmem:[%s2 + $0x8] sm:$0xff]
    %v117 = vld [vmem:[%s2 + $0x10] sm:$0xff]
    %v118 = vld [vmem:[%s2 + $0x18] sm:$0xff]
    %v119 = vld [vmem:[%s2 + $0x20] sm:$0xff]
    %v120 = vld [vmem:[%s2 + $0x28] sm:$0xff]
    %v121 = vld [vmem:[%s2 + $0x30] sm:$0xff]
    %v122 = vld [vmem:[%s2 + $0x38] sm:$0xff]
    %v123 = vld [vmem:[%s2 + $0x40] sm:$0xff]
    %v124 = vld [vmem:[%s2 + $0x48] sm:$0xff]
    %v125 = vld [vmem:[%s2 + $0x50] sm:$0xff]
    %v126 = vld [vmem:[%s2 + $0x58] sm:$0xff]
    %v127 = vld [vmem:[%s2 + $0x60] sm:$0xff]
    %v128 = vld [vmem:[%s2 + $0x68] sm:$0xff]
    %v129 = vld [vmem:[%s2 + $0x70] sm:$0xff]
    %v130 = vld [vmem:[%s2 + $0x78] sm:$0xff]
    %v131 = vstv %s50
    %v132 = vmul.f32 %v131, %v115
    %v133 = vmul.f32 %v131, %v116
    %v134 = vmul.f32 %v131, %v117
    %v135 = vmul.f32 %v131, %v118
    %v136 = vmul.f32 %v131, %v119
    %v137 = vmul.f32 %v131, %v120
    %v138 = vmul.f32 %v131, %v121
    %v139 = vmul.f32 %v131, %v122
    %v140 = vmul.f32 %v131, %v123
    %v141 = vmul.f32 %v131, %v124
    %v142 = vmul.f32 %v131, %v125
    %v143 = vmul.f32 %v131, %v126
    %v144 = vmul.f32 %v131, %v127
    %v145 = vmul.f32 %v131, %v128
    %v146 = vmul.f32 %v131, %v129
    %v147 = vmul.f32 %v131, %v130
    %v148 = vadd.f32 %v84, %v132
    %v149 = vadd.f32 %v86, %v133
    %v150 = vadd.f32 %v88, %v134
    %v151 = vadd.f32 %v90, %v135
    %v152 = vadd.f32 %v92, %v136
    %v153 = vadd.f32 %v94, %v137
    %v154 = vadd.f32 %v96, %v138
    %v155 = vadd.f32 %v98, %v139
    %v156 = vadd.f32 %v100, %v140
    %v157 = vadd.f32 %v102, %v141
    %v158 = vadd.f32 %v104, %v142
    %v159 = vadd.f32 %v106, %v143
    %v160 = vadd.f32 %v108, %v144
    %v161 = vadd.f32 %v110, %v145
    %v162 = vadd.f32 %v112, %v146
    %v163 = vadd.f32 %v114, %v147
    %v164 = vld [vmem:[%s3] sm:$0xff]
    %v165 = vld [vmem:[%s3 + $0x8] sm:$0xff]
    %v166 = vld [vmem:[%s3 + $0x10] sm:$0xff]
    %v167 = vld [vmem:[%s3 + $0x18] sm:$0xff]
    %v168 = vld [vmem:[%s3 + $0x20] sm:$0xff]
    %v169 = vld [vmem:[%s3 + $0x28] sm:$0xff]
    %v170 = vld [vmem:[%s3 + $0x30] sm:$0xff]
    %v171 = vld [vmem:[%s3 + $0x38] sm:$0xff]
    %v172 = vld [vmem:[%s3 + $0x40] sm:$0xff]
    %v173 = vld [vmem:[%s3 + $0x48] sm:$0xff]
    %v174 = vld [vmem:[%s3 + $0x50] sm:$0xff]
    %v175 = vld [vmem:[%s3 + $0x58] sm:$0xff]
    %v176 = vld [vmem:[%s3 + $0x60] sm:$0xff]
    %v177 = vld [vmem:[%s3 + $0x68] sm:$0xff]
    %v178 = vld [vmem:[%s3 + $0x70] sm:$0xff]
    %v179 = vld [vmem:[%s3 + $0x78] sm:$0xff]
    %v180 = vadd.f32 %v148, %v164
    %v181 = vadd.f32 %v149, %v165
    %v182 = vadd.f32 %v150, %v166
    %v183 = vadd.f32 %v151, %v167
    %v184 = vadd.f32 %v152, %v168
    %v185 = vadd.f32 %v153, %v169
    %v186 = vadd.f32 %v154, %v170
    %v187 = vadd.f32 %v155, %v171
    %v188 = vadd.f32 %v156, %v172
    %v189 = vadd.f32 %v157, %v173
    %v190 = vadd.f32 %v158, %v174
    %v191 = vadd.f32 %v159, %v175
    %v192 = vadd.f32 %v160, %v176
    %v193 = vadd.f32 %v161, %v177
    %v194 = vadd.f32 %v162, %v178
    %v195 = vadd.f32 %v163, %v179
    %v196 = vmax.f32 %v180, 0.0
    %v197 = vmax.f32 %v181, 0.0
    %v198 = vmax.f32 %v182, 0.0
    %v199 = vmax.f32 %v183, 0.0
    %v200 = vmax.f32 %v184, 0.0
    %v201 = vmax.f32 %v185, 0.0
    %v202 = vmax.f32 %v186, 0.0
    %v203 = vmax.f32 %v187, 0.0
    %v204 = vmax.f32 %v188, 0.0
    %v205 = vmax.f32 %v189, 0.0
    %v206 = vmax.f32 %v190, 0.0
    %v207 = vmax.f32 %v191, 0.0
    %v208 = vmax.f32 %v192, 0.0
    %v209 = vmax.f32 %v193, 0.0
    %v210 = vmax.f32 %v194, 0.0
    %v211 = vmax.f32 %v195, 0.0
    %s212 = sld [smem:[#allocation2 + $0x1]]
    %v213 = vld [vmem:[#allocation6 + $0x80] sm:$0xff]
    %v214 = vld [vmem:[#allocation6 + $0x88] sm:$0xff]
    %v215 = vld [vmem:[#allocation6 + $0x90] sm:$0xff]
    %v216 = vld [vmem:[#allocation6 + $0x98] sm:$0xff]
    %v217 = vld [vmem:[#allocation6 + $0xa0] sm:$0xff]
    %v218 = vld [vmem:[#allocation6 + $0xa8] sm:$0xff]
    %v219 = vld [vmem:[#allocation6 + $0xb0] sm:$0xff]
    %v220 = vld [vmem:[#allocation6 + $0xb8] sm:$0xff]
    %v221 = vld [vmem:[#allocation6 + $0xc0] sm:$0xff]
    %v222 = vld [vmem:[#allocation6 + $0xc8] sm:$0xff]
    %v223 = vld [vmem:[#allocation6 + $0xd0] sm:$0xff]
    %v224 = vld [vmem:[#allocation6 + $0xd8] sm:$0xff]
    %v225 = vld [vmem:[#allocation6 + $0xe0] sm:$0xff]
    %v226 = vld [vmem:[#allocation6 + $0xe8] sm:$0xff]
    %v227 = vld [vmem:[#allocation6 + $0xf0] sm:$0xff]
    %v228 = vld [vmem:[#allocation6 + $0xf8] sm:$0xff]
    %230 = vset.pattern.permute.xlu0 0
    %231 = vperm.xlu0 %230, %v196
    %v232 = vpop.permute.xlu0 %231
    %235 = vset.pattern.permute.xlu0 0
    %236 = vperm.xlu0 %235, %v197
    %v237 = vpop.permute.xlu0 %236
    %240 = vset.pattern.permute.xlu0 0
    %241 = vperm.xlu0 %240, %v198
    %v242 = vpop.permute.xlu0 %241
    %245 = vset.pattern.permute.xlu0 0
    %246 = vperm.xlu0 %245, %v199
    %v247 = vpop.permute.xlu0 %246
    %250 = vset.pattern.permute.xlu0 0
    %251 = vperm.xlu0 %250, %v200
    %v252 = vpop.permute.xlu0 %251
    %255 = vset.pattern.permute.xlu0 0
    %256 = vperm.xlu0 %255, %v201
    %v257 = vpop.permute.xlu0 %256
    %260 = vset.pattern.permute.xlu0 0
    %261 = vperm.xlu0 %260, %v202
    %v262 = vpop.permute.xlu0 %261
    %265 = vset.pattern.permute.xlu0 0
    %266 = vperm.xlu0 %265, %v203
    %v267 = vpop.permute.xlu0 %266
    %270 = vset.pattern.permute.xlu0 0
    %271 = vperm.xlu0 %270, %v204
    %v272 = vpop.permute.xlu0 %271
    %275 = vset.pattern.permute.xlu0 0
    %276 = vperm.xlu0 %275, %v205
    %v277 = vpop.permute.xlu0 %276
    %280 = vset.pattern.permute.xlu0 0
    %281 = vperm.xlu0 %280, %v206
    %v282 = vpop.permute.xlu0 %281
    %285 = vset.pattern.permute.xlu0 0
    %286 = vperm.xlu0 %285, %v207
    %v287 = vpop.permute.xlu0 %286
    %290 = vset.pattern.permute.xlu0 0
    %291 = vperm.xlu0 %290, %v208
    %v292 = vpop.permute.xlu0 %291
    %295 = vset.pattern.permute.xlu0 0
    %296 = vperm.xlu0 %295, %v209
    %v297 = vpop.permute.xlu0 %296
    %300 = vset.pattern.permute.xlu0 0
    %301 = vperm.xlu0 %300, %v210
    %v302 = vpop.permute.xlu0 %301
    %305 = vset.pattern.permute.xlu0 0
    %306 = vperm.xlu0 %305, %v211
    %v307 = vpop.permute.xlu0 %306
    %v309 = vmul.f32 %v213, %v232
    %v310 = vmul.f32 %v214, %v237
    %v311 = vmul.f32 %v215, %v242
    %v312 = vmul.f32 %v216, %v247
    %v313 = vmul.f32 %v217, %v252
    %v314 = vmul.f32 %v218, %v257
    %v315 = vmul.f32 %v219, %v262
    %v316 = vmul.f32 %v220, %v267
    %v317 = vmul.f32 %v221, %v272
    %v318 = vmul.f32 %v222, %v277
    %v319 = vmul.f32 %v223, %v282
    %v320 = vmul.f32 %v224, %v287
    %v321 = vmul.f32 %v225, %v292
    %v322 = vmul.f32 %v226, %v297
    %v323 = vmul.f32 %v227, %v302
    %v324 = vmul.f32 %v228, %v307
    %v325 = vadd.f32 %v309, %v310
    %v326 = vadd.f32 %v325, %v311
    %v327 = vadd.f32 %v326, %v312
    %v328 = vadd.f32 %v327, %v313
    %v329 = vadd.f32 %v328, %v314
    %v330 = vadd.f32 %v329, %v315
    %v331 = vadd.f32 %v330, %v316
    %v332 = vadd.f32 %v331, %v317
    %v333 = vadd.f32 %v332, %v318
    %v334 = vadd.f32 %v333, %v319
    %v335 = vadd.f32 %v334, %v320
    %v336 = vadd.f32 %v335, %v321
    %v337 = vadd.f32 %v336, %v322
    %v338 = vadd.f32 %v337, %v323
    %v339 = vadd.f32 %v338, %v324
    %v340 = vrot.slane %v339, 4
    %v341 = vadd.f32 %v339, %v340
    %v342 = vrot.slane %v341, 2
    %v343 = vadd.f32 %v341, %v342
    %v344 = vrot.slane %v343, 1
    %v345 = vadd.f32 %v343, %v344
    %v346 = vld [vmem:[#allocation6 + $0x100] sm:$0x1]
    %v347 = vstv %s212
    %v348 = vmul.f32 %v347, %v346
    %v349 = vadd.f32 %v345, %v348
    %v350 = vld [vmem:[#allocation6 + $0x101] sm:$0x1]
    %v351 = vadd.f32 %v349, %v350
    %v352 = vmax.f32 %v351, 0.0
    %s353 = sld [smem:[#allocation2 + $0x2]]
    %v354 = vperm.slane %v352, 0
    %v355 = vmul.f32 %v51, %v354
    %v356 = vmul.f32 %v52, %v354
    %v357 = vmul.f32 %v53, %v354
    %v358 = vmul.f32 %v54, %v354
    %v359 = vmul.f32 %v55, %v354
    %v360 = vmul.f32 %v56, %v354
    %v361 = vmul.f32 %v57, %v354
    %v362 = vmul.f32 %v58, %v354
    %v363 = vmul.f32 %v59, %v354
    %v364 = vmul.f32 %v60, %v354
    %v365 = vmul.f32 %v61, %v354
    %v366 = vmul.f32 %v62, %v354
    %v367 = vmul.f32 %v63, %v354
    %v368 = vmul.f32 %v64, %v354
    %v369 = vmul.f32 %v65, %v354
    %v370 = vmul.f32 %v66, %v354
    %371 = vadd.xlane.f32.xlu0 %v355
    %v372 = vpop.xlane.xlu0 %371
    %373 = vadd.xlane.f32.xlu0 %v356
    %v374 = vpop.xlane.xlu0 %373
    %375 = vadd.xlane.f32.xlu0 %v357
    %v376 = vpop.xlane.xlu0 %375
    %377 = vadd.xlane.f32.xlu0 %v358
    %v378 = vpop.xlane.xlu0 %377
    %379 = vadd.xlane.f32.xlu0 %v359
    %v380 = vpop.xlane.xlu0 %379
    %381 = vadd.xlane.f32.xlu0 %v360
    %v382 = vpop.xlane.xlu0 %381
    %383 = vadd.xlane.f32.xlu0 %v361
    %v384 = vpop.xlane.xlu0 %383
    %385 = vadd.xlane.f32.xlu0 %v362
    %v386 = vpop.xlane.xlu0 %385
    %387 = vadd.xlane.f32.xlu0 %v363
    %v388 = vpop.xlane.xlu0 %387
    %389 = vadd.xlane.f32.xlu0 %v364
    %v390 = vpop.xlane.xlu0 %389
    %391 = vadd.xlane.f32.xlu0 %v365
    %v392 = vpop.xlane.xlu0 %391
    %393 = vadd.xlane.f32.xlu0 %v366
    %v394 = vpop.xlane.xlu0 %393
    %395 = vadd.xlane.f32.xlu0 %v367
    %v396 = vpop.xlane.xlu0 %395
    %397 = vadd.xlane.f32.xlu0 %v368
    %v398 = vpop.xlane.xlu0 %397
    %399 = vadd.xlane.f32.xlu0 %v369
    %v400 = vpop.xlane.xlu0 %399
    %401 = vadd.xlane.f32.xlu0 %v370
    %v402 = vpop.xlane.xlu0 %401
    %v403 = vstv %s353
    %v404 = vmul.f32 %v403, %v115
    %v405 = vmul.f32 %v403, %v116
    %v406 = vmul.f32 %v403, %v117
    %v407 = vmul.f32 %v403, %v118
    %v408 = vmul.f32 %v403, %v119
    %v409 = vmul.f32 %v403, %v120
    %v410 = vmul.f32 %v403, %v121
    %v411 = vmul.f32 %v403, %v122
    %v412 = vmul.f32 %v403, %v123
    %v413 = vmul.f32 %v403, %v124
    %v414 = vmul.f32 %v403, %v125
    %v415 = vmul.f32 %v403, %v126
    %v416 = vmul.f32 %v403, %v127
    %v417 = vmul.f32 %v403, %v128
    %v418 = vmul.f32 %v403, %v129
    %v419 = vmul.f32 %v403, %v130
    %v420 = vadd.f32 %v372, %v404
    %v421 = vadd.f32 %v374, %v405
    %v422 = vadd.f32 %v376, %v406
    %v423 = vadd.f32 %v378, %v407
    %v424 = vadd.f32 %v380, %v408
    %v425 = vadd.f32 %v382, %v409
    %v426 = vadd.f32 %v384, %v410
    %v427 = vadd.f32 %v386, %v411
    %v428 = vadd.f32 %v388, %v412
    %v429 = vadd.f32 %v390, %v413
    %v430 = vadd.f32 %v392, %v414
    %v431 = vadd.f32 %v394, %v415
    %v432 = vadd.f32 %v396, %v416
    %v433 = vadd.f32 %v398, %v417
    %v434 = vadd.f32 %v400, %v418
    %v435 = vadd.f32 %v402, %v419
    %v436 = vadd.f32 %v420, %v164
    %v437 = vadd.f32 %v421, %v165
    %v438 = vadd.f32 %v422, %v166
    %v439 = vadd.f32 %v423, %v167
    %v440 = vadd.f32 %v424, %v168
    %v441 = vadd.f32 %v425, %v169
    %v442 = vadd.f32 %v426, %v170
    %v443 = vadd.f32 %v427, %v171
    %v444 = vadd.f32 %v428, %v172
    %v445 = vadd.f32 %v429, %v173
    %v446 = vadd.f32 %v430, %v174
    %v447 = vadd.f32 %v431, %v175
    %v448 = vadd.f32 %v432, %v176
    %v449 = vadd.f32 %v433, %v177
    %v450 = vadd.f32 %v434, %v178
    %v451 = vadd.f32 %v435, %v179
    %v452 = vmax.f32 %v436, 0.0
    %v453 = vmax.f32 %v437, 0.0
    %v454 = vmax.f32 %v438, 0.0
    %v455 = vmax.f32 %v439, 0.0
    %v456 = vmax.f32 %v440, 0.0
    %v457 = vmax.f32 %v441, 0.0
    %v458 = vmax.f32 %v442, 0.0
    %v459 = vmax.f32 %v443, 0.0
    %v460 = vmax.f32 %v444, 0.0
    %v461 = vmax.f32 %v445, 0.0
    %v462 = vmax.f32 %v446, 0.0
    %v463 = vmax.f32 %v447, 0.0
    %v464 = vmax.f32 %v448, 0.0
    %v465 = vmax.f32 %v449, 0.0
    %v466 = vmax.f32 %v450, 0.0
    %v467 = vmax.f32 %v451, 0.0
    %s468 = sld [smem:[#allocation2 + $0x3]]
    %470 = vset.pattern.permute.xlu0 0
    %471 = vperm.xlu0 %470, %v452
    %v472 = vpop.permute.xlu0 %471
    %475 = vset.pattern.permute.xlu0 0
    %476 = vperm.xlu0 %475, %v453
    %v477 = vpop.permute.xlu0 %476
    %480 = vset.pattern.permute.xlu0 0
    %481 = vperm.xlu0 %480, %v454
    %v482 = vpop.permute.xlu0 %481
    %485 = vset.pattern.permute.xlu0 0
    %486 = vperm.xlu0 %485, %v455
    %v487 = vpop.permute.xlu0 %486
    %490 = vset.pattern.permute.xlu0 0
    %491 = vperm.xlu0 %490, %v456
    %v492 = vpop.permute.xlu0 %491
    %495 = vset.pattern.permute.xlu0 0
    %496 = vperm.xlu0 %495, %v457
    %v497 = vpop.permute.xlu0 %496
    %500 = vset.pattern.permute.xlu0 0
    %501 = vperm.xlu0 %500, %v458
    %v502 = vpop.permute.xlu0 %501
    %505 = vset.pattern.permute.xlu0 0
    %506 = vperm.xlu0 %505, %v459
    %v507 = vpop.permute.xlu0 %506
    %510 = vset.pattern.permute.xlu0 0
    %511 = vperm.xlu0 %510, %v460
    %v512 = vpop.permute.xlu0 %511
    %515 = vset.pattern.permute.xlu0 0
    %516 = vperm.xlu0 %515, %v461
    %v517 = vpop.permute.xlu0 %516
    %520 = vset.pattern.permute.xlu0 0
    %521 = vperm.xlu0 %520, %v462
    %v522 = vpop.permute.xlu0 %521
    %525 = vset.pattern.permute.xlu0 0
    %526 = vperm.xlu0 %525, %v463
    %v527 = vpop.permute.xlu0 %526
    %530 = vset.pattern.permute.xlu0 0
    %531 = vperm.xlu0 %530, %v464
    %v532 = vpop.permute.xlu0 %531
    %535 = vset.pattern.permute.xlu0 0
    %536 = vperm.xlu0 %535, %v465
    %v537 = vpop.permute.xlu0 %536
    %540 = vset.pattern.permute.xlu0 0
    %541 = vperm.xlu0 %540, %v466
    %v542 = vpop.permute.xlu0 %541
    %545 = vset.pattern.permute.xlu0 0
    %546 = vperm.xlu0 %545, %v467
    %v547 = vpop.permute.xlu0 %546
    %v549 = vmul.f32 %v213, %v472
    %v550 = vmul.f32 %v214, %v477
    %v551 = vmul.f32 %v215, %v482
    %v552 = vmul.f32 %v216, %v487
    %v553 = vmul.f32 %v217, %v492
    %v554 = vmul.f32 %v218, %v497
    %v555 = vmul.f32 %v219, %v502
    %v556 = vmul.f32 %v220, %v507
    %v557 = vmul.f32 %v221, %v512
    %v558 = vmul.f32 %v222, %v517
    %v559 = vmul.f32 %v223, %v522
    %v560 = vmul.f32 %v224, %v527
    %v561 = vmul.f32 %v225, %v532
    %v562 = vmul.f32 %v226, %v537
    %v563 = vmul.f32 %v227, %v542
    %v564 = vmul.f32 %v228, %v547
    %v565 = vadd.f32 %v549, %v550
    %v566 = vadd.f32 %v565, %v551
    %v567 = vadd.f32 %v566, %v552
    %v568 = vadd.f32 %v567, %v553
    %v569 = vadd.f32 %v568, %v554
    %v570 = vadd.f32 %v569, %v555
    %v571 = vadd.f32 %v570, %v556
    %v572 = vadd.f32 %v571, %v557
    %v573 = vadd.f32 %v572, %v558
    %v574 = vadd.f32 %v573, %v559
    %v575 = vadd.f32 %v574, %v560
    %v576 = vadd.f32 %v575, %v561
    %v577 = vadd.f32 %v576, %v562
    %v578 = vadd.f32 %v577, %v563
    %v579 = vadd.f32 %v578, %v564
    %v580 = vrot.slane %v579, 4
    %v581 = vadd.f32 %v579, %v580
    %v582 = vrot.slane %v581, 2
    %v583 = vadd.f32 %v581, %v582
    %v584 = vrot.slane %v583, 1
    %v585 = vadd.f32 %v583, %v584
    %v586 = vstv %s468
    %v587 = vmul.f32 %v586, %v346
    %v588 = vadd.f32 %v585, %v587
    %v589 = vadd.f32 %v588, %v350
    %v590 = vmax.f32 %v589, 0.0
    %s591 = sld [smem:[#allocation2 + $0x4]]
    %v592 = vperm.slane %v590, 0
    %v593 = vmul.f32 %v51, %v592
    %v594 = vmul.f32 %v52, %v592
    %v595 = vmul.f32 %v53, %v592
    %v596 = vmul.f32 %v54, %v592
    %v597 = vmul.f32 %v55, %v592
    %v598 = vmul.f32 %v56, %v592
    %v599 = vmul.f32 %v57, %v592
    %v600 = vmul.f32 %v58, %v592
    %v601 = vmul.f32 %v59, %v592
    %v602 = vmul.f32 %v60, %v592
    %v603 = vmul.f32 %v61, %v592
    %v604 = vmul.f32 %v62, %v592
    %v605 = vmul.f32 %v63, %v592
    %v606 = vmul.f32 %v64, %v592
    %v607 = vmul.f32 %v65, %v592
    %v608 = vmul.f32 %v66, %v592
    %609 = vadd.xlane.f32.xlu0 %v593
    %v610 = vpop.xlane.xlu0 %609
    %611 = vadd.xlane.f32.xlu0 %v594
    %v612 = vpop.xlane.xlu0 %611
    %613 = vadd.xlane.f32.xlu0 %v595
    %v614 = vpop.xlane.xlu0 %613
    %615 = vadd.xlane.f32.xlu0 %v596
    %v616 = vpop.xlane.xlu0 %615
    %617 = vadd.xlane.f32.xlu0 %v597
    %v618 = vpop.xlane.xlu0 %617
    %619 = vadd.xlane.f32.xlu0 %v598
    %v620 = vpop.xlane.xlu0 %619
    %621 = vadd.xlane.f32.xlu0 %v599
    %v622 = vpop.xlane.xlu0 %621
    %623 = vadd.xlane.f32.xlu0 %v600
    %v624 = vpop.xlane.xlu0 %623
    %625 = vadd.xlane.f32.xlu0 %v601
    %v626 = vpop.xlane.xlu0 %625
    %627 = vadd.xlane.f32.xlu0 %v602
    %v628 = vpop.xlane.xlu0 %627
    %629 = vadd.xlane.f32.xlu0 %v603
    %v630 = vpop.xlane.xlu0 %629
    %631 = vadd.xlane.f32.xlu0 %v604
    %v632 = vpop.xlane.xlu0 %631
    %633 = vadd.xlane.f32.xlu0 %v605
    %v634 = vpop.xlane.xlu0 %633
    %635 = vadd.xlane.f32.xlu0 %v606
    %v636 = vpop.xlane.xlu0 %635
    %637 = vadd.xlane.f32.xlu0 %v607
    %v638 = vpop.xlane.xlu0 %637
    %639 = vadd.xlane.f32.xlu0 %v608
    %v640 = vpop.xlane.xlu0 %639
    %v641 = vstv %s591
    %v642 = vmul.f32 %v641, %v115
    %v643 = vmul.f32 %v641, %v116
    %v644 = vmul.f32 %v641, %v117
    %v645 = vmul.f32 %v641, %v118
    %v646 = vmul.f32 %v641, %v119
    %v647 = vmul.f32 %v641, %v120
    %v648 = vmul.f32 %v641, %v121
    %v649 = vmul.f32 %v641, %v122
    %v650 = vmul.f32 %v641, %v123
    %v651 = vmul.f32 %v641, %v124
    %v652 = vmul.f32 %v641, %v125
    %v653 = vmul.f32 %v641, %v126
    %v654 = vmul.f32 %v641, %v127
    %v655 = vmul.f32 %v641, %v128
    %v656 = vmul.f32 %v641, %v129
    %v657 = vmul.f32 %v641, %v130
    %v658 = vadd.f32 %v610, %v642
    %v659 = vadd.f32 %v612, %v643
    %v660 = vadd.f32 %v614, %v644
    %v661 = vadd.f32 %v616, %v645
    %v662 = vadd.f32 %v618, %v646
    %v663 = vadd.f32 %v620, %v647
    %v664 = vadd.f32 %v622, %v648
    %v665 = vadd.f32 %v624, %v649
    %v666 = vadd.f32 %v626, %v650
    %v667 = vadd.f32 %v628, %v651
    %v668 = vadd.f32 %v630, %v652
    %v669 = vadd.f32 %v632, %v653
    %v670 = vadd.f32 %v634, %v654
    %v671 = vadd.f32 %v636, %v655
    %v672 = vadd.f32 %v638, %v656
    %v673 = vadd.f32 %v640, %v657
    %v674 = vadd.f32 %v658, %v164
    %v675 = vadd.f32 %v659, %v165
    %v676 = vadd.f32 %v660, %v166
    %v677 = vadd.f32 %v661, %v167
    %v678 = vadd.f32 %v662, %v168
    %v679 = vadd.f32 %v663, %v169
    %v680 = vadd.f32 %v664, %v170
    %v681 = vadd.f32 %v665, %v171
    %v682 = vadd.f32 %v666, %v172
    %v683 = vadd.f32 %v667, %v173
    %v684 = vadd.f32 %v668, %v174
    %v685 = vadd.f32 %v669, %v175
    %v686 = vadd.f32 %v670, %v176
    %v687 = vadd.f32 %v671, %v177
    %v688 = vadd.f32 %v672, %v178
    %v689 = vadd.f32 %v673, %v179
    %v690 = vmax.f32 %v674, 0.0
    %v691 = vmax.f32 %v675, 0.0
    %v692 = vmax.f32 %v676, 0.0
    %v693 = vmax.f32 %v677, 0.0
    %v694 = vmax.f32 %v678, 0.0
    %v695 = vmax.f32 %v679, 0.0
    %v696 = vmax.f32 %v680, 0.0
    %v697 = vmax.f32 %v681, 0.0
    %v698 = vmax.f32 %v682, 0.0
    %v699 = vmax.f32 %v683, 0.0
    %v700 = vmax.f32 %v684, 0.0
    %v701 = vmax.f32 %v685, 0.0
    %v702 = vmax.f32 %v686, 0.0
    %v703 = vmax.f32 %v687, 0.0
    %v704 = vmax.f32 %v688, 0.0
    %v705 = vmax.f32 %v689, 0.0
    %s706 = sld [smem:[#allocation2 + $0x5]]
    %708 = vset.pattern.permute.xlu0 0
    %709 = vperm.xlu0 %708, %v690
    %v710 = vpop.permute.xlu0 %709
    %713 = vset.pattern.permute.xlu0 0
    %714 = vperm.xlu0 %713, %v691
    %v715 = vpop.permute.xlu0 %714
    %718 = vset.pattern.permute.xlu0 0
    %719 = vperm.xlu0 %718, %v692
    %v720 = vpop.permute.xlu0 %719
    %723 = vset.pattern.permute.xlu0 0
    %724 = vperm.xlu0 %723, %v693
    %v725 = vpop.permute.xlu0 %724
    %728 = vset.pattern.permute.xlu0 0
    %729 = vperm.xlu0 %728, %v694
    %v730 = vpop.permute.xlu0 %729
    %733 = vset.pattern.permute.xlu0 0
    %734 = vperm.xlu0 %733, %v695
    %v735 = vpop.permute.xlu0 %734
    %738 = vset.pattern.permute.xlu0 0
    %739 = vperm.xlu0 %738, %v696
    %v740 = vpop.permute.xlu0 %739
    %743 = vset.pattern.permute.xlu0 0
    %744 = vperm.xlu0 %743, %v697
    %v745 = vpop.permute.xlu0 %744
    %748 = vset.pattern.permute.xlu0 0
    %749 = vperm.xlu0 %748, %v698
    %v750 = vpop.permute.xlu0 %749
    %753 = vset.pattern.permute.xlu0 0
    %754 = vperm.xlu0 %753, %v699
    %v755 = vpop.permute.xlu0 %754
    %758 = vset.pattern.permute.xlu0 0
    %759 = vperm.xlu0 %758, %v700
    %v760 = vpop.permute.xlu0 %759
    %763 = vset.pattern.permute.xlu0 0
    %764 = vperm.xlu0 %763, %v701
    %v765 = vpop.permute.xlu0 %764
    %768 = vset.pattern.permute.xlu0 0
    %769 = vperm.xlu0 %768, %v702
    %v770 = vpop.permute.xlu0 %769
    %773 = vset.pattern.permute.xlu0 0
    %774 = vperm.xlu0 %773, %v703
    %v775 = vpop.permute.xlu0 %774
    %778 = vset.pattern.permute.xlu0 0
    %779 = vperm.xlu0 %778, %v704
    %v780 = vpop.permute.xlu0 %779
    %783 = vset.pattern.permute.xlu0 0
    %784 = vperm.xlu0 %783, %v705
    %v785 = vpop.permute.xlu0 %784
    %v787 = vmul.f32 %v213, %v710
    %v788 = vmul.f32 %v214, %v715
    %v789 = vmul.f32 %v215, %v720
    %v790 = vmul.f32 %v216, %v725
    %v791 = vmul.f32 %v217, %v730
    %v792 = vmul.f32 %v218, %v735
    %v793 = vmul.f32 %v219, %v740
    %v794 = vmul.f32 %v220, %v745
    %v795 = vmul.f32 %v221, %v750
    %v796 = vmul.f32 %v222, %v755
    %v797 = vmul.f32 %v223, %v760
    %v798 = vmul.f32 %v224, %v765
    %v799 = vmul.f32 %v225, %v770
    %v800 = vmul.f32 %v226, %v775
    %v801 = vmul.f32 %v227, %v780
    %v802 = vmul.f32 %v228, %v785
    %v803 = vadd.f32 %v787, %v788
    %v804 = vadd.f32 %v803, %v789
    %v805 = vadd.f32 %v804, %v790
    %v806 = vadd.f32 %v805, %v791
    %v807 = vadd.f32 %v806, %v792
    %v808 = vadd.f32 %v807, %v793
    %v809 = vadd.f32 %v808, %v794
    %v810 = vadd.f32 %v809, %v795
    %v811 = vadd.f32 %v810, %v796
    %v812 = vadd.f32 %v811, %v797
    %v813 = vadd.f32 %v812, %v798
    %v814 = vadd.f32 %v813, %v799
    %v815 = vadd.f32 %v814, %v800
    %v816 = vadd.f32 %v815, %v801
    %v817 = vadd.f32 %v816, %v802
    %v818 = vrot.slane %v817, 4
    %v819 = vadd.f32 %v817, %v818
    %v820 = vrot.slane %v819, 2
    %v821 = vadd.f32 %v819, %v820
    %v822 = vrot.slane %v821, 1
    %v823 = vadd.f32 %v821, %v822
    %v824 = vstv %s706
    %v825 = vmul.f32 %v824, %v346
    %v826 = vadd.f32 %v823, %v825
    %v827 = vadd.f32 %v826, %v350
    %v828 = vmax.f32 %v827, 0.0
    %s829 = sld [smem:[#allocation2 + $0x6]]
    %v830 = vperm.slane %v828, 0
    %v831 = vmul.f32 %v51, %v830
    %v832 = vmul.f32 %v52, %v830
    %v833 = vmul.f32 %v53, %v830
    %v834 = vmul.f32 %v54, %v830
    %v835 = vmul.f32 %v55, %v830
    %v836 = vmul.f32 %v56, %v830
    %v837 = vmul.f32 %v57, %v830
    %v838 = vmul.f32 %v58, %v830
    %v839 = vmul.f32 %v59, %v830
    %v840 = vmul.f32 %v60, %v830
    %v841 = vmul.f32 %v61, %v830
    %v842 = vmul.f32 %v62, %v830
    %v843 = vmul.f32 %v63, %v830
    %v844 = vmul.f32 %v64, %v830
    %v845 = vmul.f32 %v65, %v830
    %v846 = vmul.f32 %v66, %v830
    %847 = vadd.xlane.f32.xlu0 %v831
    %v848 = vpop.xlane.xlu0 %847
    %849 = vadd.xlane.f32.xlu0 %v832
    %v850 = vpop.xlane.xlu0 %849
    %851 = vadd.xlane.f32.xlu0 %v833
    %v852 = vpop.xlane.xlu0 %851
    %853 = vadd.xlane.f32.xlu0 %v834
    %v854 = vpop.xlane.xlu0 %853
    %855 = vadd.xlane.f32.xlu0 %v835
    %v856 = vpop.xlane.xlu0 %855
    %857 = vadd.xlane.f32.xlu0 %v836
    %v858 = vpop.xlane.xlu0 %857
    %859 = vadd.xlane.f32.xlu0 %v837
    %v860 = vpop.xlane.xlu0 %859
    %861 = vadd.xlane.f32.xlu0 %v838
    %v862 = vpop.xlane.xlu0 %861
    %863 = vadd.xlane.f32.xlu0 %v839
    %v864 = vpop.xlane.xlu0 %863
    %865 = vadd.xlane.f32.xlu0 %v840
    %v866 = vpop.xlane.xlu0 %865
    %867 = vadd.xlane.f32.xlu0 %v841
    %v868 = vpop.xlane.xlu0 %867
    %869 = vadd.xlane.f32.xlu0 %v842
    %v870 = vpop.xlane.xlu0 %869
    %871 = vadd.xlane.f32.xlu0 %v843
    %v872 = vpop.xlane.xlu0 %871
    %873 = vadd.xlane.f32.xlu0 %v844
    %v874 = vpop.xlane.xlu0 %873
    %875 = vadd.xlane.f32.xlu0 %v845
    %v876 = vpop.xlane.xlu0 %875
    %877 = vadd.xlane.f32.xlu0 %v846
    %v878 = vpop.xlane.xlu0 %877
    %v879 = vstv %s829
    %v880 = vmul.f32 %v879, %v115
    %v881 = vmul.f32 %v879, %v116
    %v882 = vmul.f32 %v879, %v117
    %v883 = vmul.f32 %v879, %v118
    %v884 = vmul.f32 %v879, %v119
    %v885 = vmul.f32 %v879, %v120
    %v886 = vmul.f32 %v879, %v121
    %v887 = vmul.f32 %v879, %v122
    %v888 = vmul.f32 %v879, %v123
    %v889 = vmul.f32 %v879, %v124
    %v890 = vmul.f32 %v879, %v125
    %v891 = vmul.f32 %v879, %v126
    %v892 = vmul.f32 %v879, %v127
    %v893 = vmul.f32 %v879, %v128
    %v894 = vmul.f32 %v879, %v129
    %v895 = vmul.f32 %v879, %v130
    %v896 = vadd.f32 %v848, %v880
    %v897 = vadd.f32 %v850, %v881
    %v898 = vadd.f32 %v852, %v882
    %v899 = vadd.f32 %v854, %v883
    %v900 = vadd.f32 %v856, %v884
    %v901 = vadd.f32 %v858, %v885
    %v902 = vadd.f32 %v860, %v886
    %v903 = vadd.f32 %v862, %v887
    %v904 = vadd.f32 %v864, %v888
    %v905 = vadd.f32 %v866, %v889
    %v906 = vadd.f32 %v868, %v890
    %v907 = vadd.f32 %v870, %v891
    %v908 = vadd.f32 %v872, %v892
    %v909 = vadd.f32 %v874, %v893
    %v910 = vadd.f32 %v876, %v894
    %v911 = vadd.f32 %v878, %v895
    %v912 = vadd.f32 %v896, %v164
    %v913 = vadd.f32 %v897, %v165
    %v914 = vadd.f32 %v898, %v166
    %v915 = vadd.f32 %v899, %v167
    %v916 = vadd.f32 %v900, %v168
    %v917 = vadd.f32 %v901, %v169
    %v918 = vadd.f32 %v902, %v170
    %v919 = vadd.f32 %v903, %v171
    %v920 = vadd.f32 %v904, %v172
    %v921 = vadd.f32 %v905, %v173
    %v922 = vadd.f32 %v906, %v174
    %v923 = vadd.f32 %v907, %v175
    %v924 = vadd.f32 %v908, %v176
    %v925 = vadd.f32 %v909, %v177
    %v926 = vadd.f32 %v910, %v178
    %v927 = vadd.f32 %v911, %v179
    %v928 = vmax.f32 %v912, 0.0
    %v929 = vmax.f32 %v913, 0.0
    %v930 = vmax.f32 %v914, 0.0
    %v931 = vmax.f32 %v915, 0.0
    %v932 = vmax.f32 %v916, 0.0
    %v933 = vmax.f32 %v917, 0.0
    %v934 = vmax.f32 %v918, 0.0
    %v935 = vmax.f32 %v919, 0.0
    %v936 = vmax.f32 %v920, 0.0
    %v937 = vmax.f32 %v921, 0.0
    %v938 = vmax.f32 %v922, 0.0
    %v939 = vmax.f32 %v923, 0.0
    %v940 = vmax.f32 %v924, 0.0
    %v941 = vmax.f32 %v925, 0.0
    %v942 = vmax.f32 %v926, 0.0
    %v943 = vmax.f32 %v927, 0.0
    %s944 = sld [smem:[#allocation2 + $0x7]]
    %946 = vset.pattern.permute.xlu0 0
    %947 = vperm.xlu0 %946, %v928
    %v948 = vpop.permute.xlu0 %947
    %951 = vset.pattern.permute.xlu0 0
    %952 = vperm.xlu0 %951, %v929
    %v953 = vpop.permute.xlu0 %952
    %956 = vset.pattern.permute.xlu0 0
    %957 = vperm.xlu0 %956, %v930
    %v958 = vpop.permute.xlu0 %957
    %961 = vset.pattern.permute.xlu0 0
    %962 = vperm.xlu0 %961, %v931
    %v963 = vpop.permute.xlu0 %962
    %966 = vset.pattern.permute.xlu0 0
    %967 = vperm.xlu0 %966, %v932
    %v968 = vpop.permute.xlu0 %967
    %971 = vset.pattern.permute.xlu0 0
    %972 = vperm.xlu0 %971, %v933
    %v973 = vpop.permute.xlu0 %972
    %976 = vset.pattern.permute.xlu0 0
    %977 = vperm.xlu0 %976, %v934
    %v978 = vpop.permute.xlu0 %977
    %981 = vset.pattern.permute.xlu0 0
    %982 = vperm.xlu0 %981, %v935
    %v983 = vpop.permute.xlu0 %982
    %986 = vset.pattern.permute.xlu0 0
    %987 = vperm.xlu0 %986, %v936
    %v988 = vpop.permute.xlu0 %987
    %991 = vset.pattern.permute.xlu0 0
    %992 = vperm.xlu0 %991, %v937
    %v993 = vpop.permute.xlu0 %992
    %996 = vset.pattern.permute.xlu0 0
    %997 = vperm.xlu0 %996, %v938
    %v998 = vpop.permute.xlu0 %997
    %1001 = vset.pattern.permute.xlu0 0
    %1002 = vperm.xlu0 %1001, %v939
    %v1003 = vpop.permute.xlu0 %1002
    %1006 = vset.pattern.permute.xlu0 0
    %1007 = vperm.xlu0 %1006, %v940
    %v1008 = vpop.permute.xlu0 %1007
    %1011 = vset.pattern.permute.xlu0 0
    %1012 = vperm.xlu0 %1011, %v941
    %v1013 = vpop.permute.xlu0 %1012
    %1016 = vset.pattern.permute.xlu0 0
    %1017 = vperm.xlu0 %1016, %v942
    %v1018 = vpop.permute.xlu0 %1017
    %1021 = vset.pattern.permute.xlu0 0
    %1022 = vperm.xlu0 %1021, %v943
    %v1023 = vpop.permute.xlu0 %1022
    %v1025 = vmul.f32 %v213, %v948
    %v1026 = vmul.f32 %v214, %v953
    %v1027 = vmul.f32 %v215, %v958
    %v1028 = vmul.f32 %v216, %v963
    %v1029 = vmul.f32 %v217, %v968
    %v1030 = vmul.f32 %v218, %v973
    %v1031 = vmul.f32 %v219, %v978
    %v1032 = vmul.f32 %v220, %v983
    %v1033 = vmul.f32 %v221, %v988
    %v1034 = vmul.f32 %v222, %v993
    %v1035 = vmul.f32 %v223, %v998
    %v1036 = vmul.f32 %v224, %v1003
    %v1037 = vmul.f32 %v225, %v1008
    %v1038 = vmul.f32 %v226, %v1013
    %v1039 = vmul.f32 %v227, %v1018
    %v1040 = vmul.f32 %v228, %v1023
    %v1041 = vadd.f32 %v1025, %v1026
    %v1042 = vadd.f32 %v1041, %v1027
    %v1043 = vadd.f32 %v1042, %v1028
    %v1044 = vadd.f32 %v1043, %v1029
    %v1045 = vadd.f32 %v1044, %v1030
    %v1046 = vadd.f32 %v1045, %v1031
    %v1047 = vadd.f32 %v1046, %v1032
    %v1048 = vadd.f32 %v1047, %v1033
    %v1049 = vadd.f32 %v1048, %v1034
    %v1050 = vadd.f32 %v1049, %v1035
    %v1051 = vadd.f32 %v1050, %v1036
    %v1052 = vadd.f32 %v1051, %v1037
    %v1053 = vadd.f32 %v1052, %v1038
    %v1054 = vadd.f32 %v1053, %v1039
    %v1055 = vadd.f32 %v1054, %v1040
    %v1056 = vrot.slane %v1055, 4
    %v1057 = vadd.f32 %v1055, %v1056
    %v1058 = vrot.slane %v1057, 2
    %v1059 = vadd.f32 %v1057, %v1058
    %v1060 = vrot.slane %v1059, 1
    %v1061 = vadd.f32 %v1059, %v1060
    %v1062 = vstv %s944
    %v1063 = vmul.f32 %v1062, %v346
    %v1064 = vadd.f32 %v1061, %v1063
    %v1065 = vadd.f32 %v1064, %v350
    %v1066 = vmax.f32 %v1065, 0.0
    %s1067 = sld [smem:[#allocation2 + $0x8]]
    %v1068 = vld [vmem:[#allocation6 + $0x102] sm:$0x1]
    %v1069 = vmul.f32 %v1066, %v1068
    %vm1070 = vcmask 1040384
    %v1071 = vsel %vm1070, %v1069, 0.0
    %1072 = vadd.xlane.f32.xlu0 %v1071
    %v1073 = vpop.xlane.xlu0 %1072
    %v1074 = vstv %s1067
    %v1075 = vadd.f32 %v1073, %v1074
    %vm1076 = vcmask 0
    %1077 = vst.msk [vmem:[#allocation7] sm:$0x1] %vm1076, %v1075
    // Predicated region
    $region30: #{_rnn_fast_call.1} parent=1 // pred_check
      _
    $region31: #{_rnn_fast_call.1} parent=1 // pred_check_branch
      %1079 = sbr.rel (0) target = $region33
    $region32: #{_rnn_fast_call.1} parent=1 // pred_region
      %1081 = vsyncadd [#allocation4], 0
      %s1083 = sshll.u32 [#allocation7], 4
      %s1084 = int_to_ptr.vmem [resolvable:$true] %s1083
      %s1085 = sshll.u32 %s5, 4
      %s1086 = int_to_ptr.hbm [resolvable:$true] %s1085
      %1088 = dma.vmem_to_hbm [thread:$0]  %s1084, 16, %s1086, [#allocation4]
    $region33: #{_rnn_fast_call.1} parent=1 // pred_fallthru
      _
    // Predicated region
    $region34: #{_rnn_fast_call.1} parent=1 // pred_check
      _
    $region35: #{_rnn_fast_call.1} parent=1 // pred_check_branch
      %1090 = sbr.rel (0) target = $region37
    $region36: #{_rnn_fast_call.1} parent=1 // pred_region
      %1092 = dma.done [#allocation4], 16
    $region37: #{_rnn_fast_call.1} parent=1 // pred_fallthru
      _
    %1093 = vsyncpa [#allocation3], 1
    %1094 = vsyncpa [#allocation4], 1
    %1095 = vsyncpa [#allocation5], 1

</llo_original>
